<compile_context>
chip_gen: v7x
topology: tpu7x:2x2x1
jax: 0.10.0
libtpu: 0.0.40
codegen_flags: <defaults>
</compile_context>

<pallas_src>
import functools

import jax
import jax.numpy as jnp
from jax.experimental import pallas as pl
from jax.experimental.pallas import tpu as pltpu


def _gat_attn_kernel(f1_ref, f2_ref, bias_ref, h_ref, out_ref, *, alpha):
    """One (batch, query-row-tile) step of GAT attention.

    f1_ref:   (1, Tq, 1)   query-side logits  h_i . a[:out_c]
    f2_ref:   (1, 1,  N)   key-side logits    h_j . a[out_c:]  (lane-dense row)
    bias_ref: (Tq, N)      0.0 where (adj + I) > 0 else -1e12
    h_ref:    (1, N, Cp)   projected node features, feature dim padded to 128k
    out_ref:  (1, Tq, Cp)
    """
    # e_ij = LeakyReLU(f1_i + f2_j): (Tq,1) + (1,N) broadcast add, pure VPU.
    e = f1_ref[0] + f2_ref[0]                               # (Tq, N)
    e = jnp.where(e > 0, e, jnp.float32(alpha) * e)         # LeakyReLU(alpha)

    # adjacency masking folded into a precomputed additive bias
    att = e + bias_ref[...]                                 # (Tq, N)

    # row-stable softmax; reciprocal on the EUP slot (co-issues with VPU)
    att = att - jnp.max(att, axis=-1, keepdims=True)
    p = jnp.exp(att)
    denom = jnp.sum(p, axis=-1, keepdims=True)
    p = p * pl.reciprocal(denom, approx=True)

    # h' = attention @ h  (lane-dense (Tq, Cp) store)
    out_ref[0] = jnp.dot(p, h_ref[0],
                         preferred_element_type=jnp.float32).astype(out_ref.dtype)


def gat_forward(features, adj, W, a, *, alpha=0.2, block_q=None):
    """GraphAttentionLayer.forward: features (B,N,in_c), adj (N,N) -> (B,N,out_c)."""
    features = features.astype(jnp.float32)
    B, N, _ = features.shape
    out_c = W.shape[1]

    # ---- tiny projections hoisted out of the kernel (lane-thin operands) ----
    h = jnp.einsum("bni,io->bno", features, W.astype(jnp.float32))      # (B, N, out_c)
    a1 = a[:out_c, :].astype(jnp.float32)                               # (out_c, 1)
    a2 = a[out_c:, :].astype(jnp.float32)                               # (out_c, 1)
    f1 = jnp.einsum("bno,oe->bne", h, a1)                               # (B, N, 1)
    f2 = jnp.transpose(jnp.einsum("bno,oe->bne", h, a2), (0, 2, 1))     # (B, 1, N)

    # ---- adjacency mask precomputed once as an additive bias ---------------
    # NOTE: could be int8 to shrink VMEM 4x at very large N; f32 kept here so
    # small (Tq, N) blocks stay on the safe (8,128)-tiling path.
    bias = jnp.where((adj + jnp.eye(N, dtype=adj.dtype)) > 0,
                     jnp.float32(0.0), jnp.float32(-1e12))              # (N, N)

    # ---- lane-dense padded feature dim for the attn@h matmul / stores ------
    c_pad = ((out_c + 127) // 128) * 128
    h_p = jnp.pad(h, ((0, 0), (0, 0), (0, c_pad - out_c)))              # (B, N, c_pad)

    # ---- query-row tile selection (bounds VMEM to Tq x N blocks) -----------
    if block_q is None:
        block_q = min(N, 512)
    if N % block_q != 0 or (block_q % 8 != 0 and block_q != N):
        block_q = N
    n_q = N // block_q

    cost = pl.CostEstimate(
        flops=int(2 * B * N * N * c_pad + 6 * B * N * N),
        transcendentals=int(B * N * N),
        bytes_accessed=int(B * N * N * 4            # bias stream
                           + B * n_q * N * c_pad * 4  # h per row tile
                           + B * N * c_pad * 4        # output
                           + 2 * B * N * 4),          # f1 / f2
    )

    kernel = functools.partial(_gat_attn_kernel, alpha=alpha)
    out_p = pl.pallas_call(
        kernel,
        out_shape=jax.ShapeDtypeStruct((B, N, c_pad), jnp.float32),
        grid_spec=pltpu.PrefetchScalarGridSpec(
            num_scalar_prefetch=0,
            grid=(B, n_q),
            in_specs=[
                pl.BlockSpec((1, block_q, 1), lambda b, q: (b, q, 0)),   # f1
                pl.BlockSpec((1, 1, N), lambda b, q: (b, 0, 0)),         # f2 row
                pl.BlockSpec((block_q, N), lambda b, q: (q, 0)),         # bias
                pl.BlockSpec((1, N, c_pad), lambda b, q: (b, 0, 0)),     # h (padded)
            ],
            out_specs=pl.BlockSpec((1, block_q, c_pad), lambda b, q: (b, q, 0)),
        ),
        compiler_params=pltpu.CompilerParams(
            dimension_semantics=("parallel", "parallel")),
        cost_estimate=cost,
    )(f1, f2, bias, h_p)

    return out_p[..., :out_c]


def _xavier_uniform(key, shape, gain):
    fan_in, fan_out = shape[0], shape[1]
    bound = gain * jnp.sqrt(6.0 / (fan_in + fan_out))
    return jax.random.uniform(key, shape, jnp.float32, -bound, bound)


def _reference(features, adj, W, a, alpha=0.2):
    B, N, _ = features.shape
    out_c = W.shape[1]
    adj_i = adj + jnp.eye(N, dtype=adj.dtype)
    h = jnp.einsum("bni,io->bno", features, W)
    a1, a2 = a[:out_c, :], a[out_c:, :]
    e = h @ a1 + jnp.transpose(h @ a2, (0, 2, 1))            # (B, N, N)
    e = jnp.where(e > 0, e, alpha * e)
    att = jnp.where(adj_i[None] > 0, e, -1e12)
    att = jax.nn.softmax(att, axis=2)
    return jnp.einsum("bij,bjo->bio", att, h)


if __name__ == "__main__":
    B, N, in_c, out_c = 2, 16, 4, 8
    alpha = 0.2
    key = jax.random.PRNGKey(0)
    k_feat, k_adj, k_w, k_a = jax.random.split(key, 4)

    features = jax.random.normal(k_feat, (B, N, in_c), jnp.float32)
    # synthetic sparse-ish adjacency (0/1 entries)
    adj = (jax.random.uniform(k_adj, (N, N)) > 0.7).astype(jnp.float32)

    W = _xavier_uniform(k_w, (in_c, out_c), gain=1.414)
    a = _xavier_uniform(k_a, (2 * out_c, 1), gain=1.414)

    # block_q=8 exercises the query-row tiling (grid = (2 batches, 2 row tiles)).
    out = gat_forward(features, adj, W, a, alpha=alpha, block_q=8)
    out = jax.block_until_ready(out)

    ref = _reference(features, adj, W, a, alpha=alpha)
    assert out.shape == (B, N, out_c)
    # Tolerance relaxed vs. exact f32 to cover the EUP approximate reciprocal
    # used for the softmax denominator (per the perf review).
    assert jnp.allclose(out, ref, atol=1e-2, rtol=1e-2)
    print("KERNEL_OK")
</pallas_src>

<mosaic_0001>
module attributes {stable_mosaic.version = 11 : i64} {
  func.func @_gat_attn_kernel(%arg0: i32, %arg1: i32, %arg2: memref<1x8x1xf32, #tpu.memory_space<vmem>>, %arg3: memref<1x1x16xf32, #tpu.memory_space<vmem>>, %arg4: memref<8x16xf32, #tpu.memory_space<vmem>>, %arg5: memref<1x16x128xf32, #tpu.memory_space<vmem>>, %arg6: memref<1x8x128xf32, #tpu.memory_space<vmem>>) attributes {dimension_semantics = [#tpu.dimension_semantics<parallel>, #tpu.dimension_semantics<parallel>], iteration_bounds = array<i64: 2, 2>, scalar_prefetch = 0 : i64, scratch_operands = 0 : i64, tpu.core_type = #tpu.core_type<tc>, window_params = [{transform_indices = @transform_0, window_bounds = array<i64: 1, 8, 1>}, {transform_indices = @transform_1, window_bounds = array<i64: 1, 1, 16>}, {transform_indices = @transform_2, window_bounds = array<i64: 8, 16>}, {transform_indices = @transform_3, window_bounds = array<i64: 1, 16, 128>}, {transform_indices = @transform_4, window_bounds = array<i64: 1, 8, 128>}]} {
    %c0 = arith.constant 0 : index
    %c0_0 = arith.constant 0 : index
    %c0_1 = arith.constant 0 : index
    %0 = vector.load %arg2[%c0, %c0_0, %c0_1] : memref<1x8x1xf32, #tpu.memory_space<vmem>>, vector<1x8x1xf32>
    %1 = vector.shape_cast %0 : vector<1x8x1xf32> to vector<8x1xf32>
    %c0_2 = arith.constant 0 : index
    %c0_3 = arith.constant 0 : index
    %c0_4 = arith.constant 0 : index
    %2 = vector.load %arg3[%c0_2, %c0_3, %c0_4] : memref<1x1x16xf32, #tpu.memory_space<vmem>>, vector<1x1x16xf32>
    %3 = vector.shape_cast %2 : vector<1x1x16xf32> to vector<1x16xf32>
    %4 = vector.broadcast %1 : vector<8x1xf32> to vector<8x16xf32>
    %5 = vector.broadcast %3 : vector<1x16xf32> to vector<8x16xf32>
    %6 = arith.addf %4, %5 : vector<8x16xf32>
    %cst = arith.constant 0.000000e+00 : f32
    %7 = vector.broadcast %cst : f32 to vector<8x16xf32>
    %8 = arith.cmpf ogt, %6, %7 : vector<8x16xf32>
    %cst_5 = arith.constant 2.000000e-01 : f32
    %9 = vector.broadcast %cst_5 : f32 to vector<8x16xf32>
    %10 = arith.mulf %9, %6 : vector<8x16xf32>
    %11 = arith.select %8, %6, %10 : vector<8x16xi1>, vector<8x16xf32>
    %c0_6 = arith.constant 0 : index
    %c0_7 = arith.constant 0 : index
    %12 = vector.load %arg4[%c0_6, %c0_7] : memref<8x16xf32, #tpu.memory_space<vmem>>, vector<8x16xf32>
    %13 = arith.addf %11, %12 : vector<8x16xf32>
    %cst_8 = arith.constant dense<0xFF800000> : vector<8xf32>
    %14 = vector.multi_reduction <maximumf>, %13, %cst_8 [1] : vector<8x16xf32> to vector<8xf32>
    %15 = vector.shape_cast %14 : vector<8xf32> to vector<8x1xf32>
    %16 = vector.broadcast %15 : vector<8x1xf32> to vector<8x16xf32>
    %17 = arith.subf %13, %16 : vector<8x16xf32>
    %18 = math.exp %17 : vector<8x16xf32>
    %cst_9 = arith.constant dense<0.000000e+00> : vector<8xf32>
    %19 = vector.multi_reduction <add>, %18, %cst_9 [1] : vector<8x16xf32> to vector<8xf32>
    %20 = vector.shape_cast %19 : vector<8xf32> to vector<8x1xf32>
    %21 = tpu.reciprocal %20 {approx = true} : vector<8x1xf32> -> vector<8x1xf32>
    %22 = vector.broadcast %21 : vector<8x1xf32> to vector<8x16xf32>
    %23 = arith.mulf %18, %22 : vector<8x16xf32>
    %c0_10 = arith.constant 0 : index
    %c0_11 = arith.constant 0 : index
    %c0_12 = arith.constant 0 : index
    %24 = vector.load %arg5[%c0_10, %c0_11, %c0_12] : memref<1x16x128xf32, #tpu.memory_space<vmem>>, vector<1x16x128xf32>
    %25 = vector.shape_cast %24 : vector<1x16x128xf32> to vector<16x128xf32>
    %cst_13 = arith.constant dense<0.000000e+00> : vector<8x128xf32>
    %26 = tpu.matmul %23, %25, %cst_13 {dimension_numbers = #tpu.dot_dimension_numbers<[1], [0], [0], [1], [0, 0, 1, 1], [], []>} : vector<8x16xf32>, vector<16x128xf32>, vector<8x128xf32> -> vector<8x128xf32>
    %c0_14 = arith.constant 0 : index
    %c0_15 = arith.constant 0 : index
    %c0_16 = arith.constant 0 : index
    %27 = vector.load %arg6[%c0_14, %c0_15, %c0_16] : memref<1x8x128xf32, #tpu.memory_space<vmem>>, vector<1x8x128xf32>
    %28 = vector.shape_cast %27 : vector<1x8x128xf32> to vector<8x128xf32>
    %29 = vector.shape_cast %26 : vector<8x128xf32> to vector<1x8x128xf32>
    tpu.vector_store %arg6[%c0_14, %c0_15, %c0_16], %29 {strides = array<i32>} : memref<1x8x128xf32, #tpu.memory_space<vmem>>, vector<1x8x128xf32>,
    return
  }
  func.func @transform_0(%arg0: i32, %arg1: i32) -> (i32, i32, i32) {
    %c0_i32 = arith.constant 0 : i32
    %c0_i32_0 = arith.constant 0 : i32
    return %arg0, %arg1, %c0_i32 : i32, i32, i32
  }
  func.func @transform_1(%arg0: i32, %arg1: i32) -> (i32, i32, i32) {
    %c0_i32 = arith.constant 0 : i32
    %c0_i32_0 = arith.constant 0 : i32
    %c0_i32_1 = arith.constant 0 : i32
    return %arg0, %c0_i32, %c0_i32_0 : i32, i32, i32
  }
  func.func @transform_2(%arg0: i32, %arg1: i32) -> (i32, i32) {
    %c0_i32 = arith.constant 0 : i32
    %c0_i32_0 = arith.constant 0 : i32
    return %arg1, %c0_i32 : i32, i32
  }
  func.func @transform_3(%arg0: i32, %arg1: i32) -> (i32, i32, i32) {
    %c0_i32 = arith.constant 0 : i32
    %c0_i32_0 = arith.constant 0 : i32
    %c0_i32_1 = arith.constant 0 : i32
    return %arg0, %c0_i32, %c0_i32_0 : i32, i32, i32
  }
  func.func @transform_4(%arg0: i32, %arg1: i32) -> (i32, i32, i32) {
    %c0_i32 = arith.constant 0 : i32
    %c0_i32_0 = arith.constant 0 : i32
    return %arg0, %arg1, %c0_i32 : i32, i32, i32
  }
}

</mosaic_0001>

<llo_original>
// kernel: tpu_custom_call.1
$region0: #{tpu_custom_call.1}
  #allocation0 [shape = 'u32[]', space=smem, size = 0x4, offset = 0x4, fixed_abs, tag = 'smem constant byte address 0x4 - core index']
  #allocation1 [shape = 'u32[144,128]{1,0:T(1,128)}', space=vmem, size = 0x12000, scoped, tag = 'internal scratch']
  %s0 = inlined_call_operand.vmem [shape: f32[2,16,1], index: 0, kind: input, shape index: {}]
  %s1 = inlined_call_operand.vmem [shape: f32[2,1,16], index: 1, kind: input, shape index: {}]
  %s2 = inlined_call_operand.hbm [shape: f32[16,16], index: 2, kind: input, shape index: {}]
  %s3 = inlined_call_operand.vmem [shape: f32[2,16,128], index: 3, kind: input, shape index: {}]
  %s4 = inlined_call_operand.hbm [shape: f32[2,16,128], index: 4, kind: output, shape index: {}]
  %s5 = sld [smem:[#allocation0]]
  $region53: #{tpu_custom_call.1} parent=0
    _
  %s7 = ssub.s32 1, %s5
  %s8 = scalar_select 0, %s7, %s5
  $region1: #{tpu_custom_call.1} parent=0
    #allocation2 [shape = 'u8[8192]{0}', space=vmem, size = 0x2000, scoped, tag = 'input window, operand 2']
    #allocation3 [shape = 's32[2]{0}', space=sflag, size = 0x8, scoped, tag = 'scoped memory for tpu_custom_call.1']
    #allocation4 [shape = 's32[2]{0}', space=sflag, size = 0x8, scoped, tag = 'scoped memory for tpu_custom_call.1']
    #allocation5 [shape = 'u8[8192]{0}', space=vmem, size = 0x2000, scoped, tag = 'output window, operand 0']
    %9 = vsyncpa [#allocation3], 0
    %s10 = scalar_lea.sflag [#allocation3], 1
    %11 = vsyncpa %s10, 0
    %12 = vsyncpa [#allocation4], 0
    %s13 = scalar_lea.sflag [#allocation4], 1
    %14 = vsyncpa %s13, 0
    loop: start=0, step=1, limit=6
    $region2: #{tpu_custom_call.1} parent=1 // loop_pre_header
      _
    $region3: #{tpu_custom_call.1} parent=1 // loop_header
      %s16 = sphi 0, %s20
      %p17 = scmp.ge.s32.totalorder %s16, 6
      %s23 = sphi 0, %s35
      %s24 = sphi 0, %s31
      %s25 = sphi 0, %s23
      %s26 = sphi 0, %s24
      %s27 = sphi 0, %s25
      %s28 = sphi 0, %s26
      %s40 = sphi 0, %s42
      %s43 = sphi 0, %s40
      %s44 = sphi 0, %s43
      %s60 = sphi 0, %s44
      %s66 = sphi 0, %s68
      %s69 = sphi 0, %s66
      %s70 = sphi 0, %s69
      %s86 = sphi 0, %s70
      %s92 = sphi 0, %s94
      %s95 = sphi 0, %s92
      %s96 = sphi 0, %s95
      %s112 = sphi 0, %s96
      %s118 = sphi 0, %s120
      %s121 = sphi 0, %s118
      %s122 = sphi 0, %s121
      %s138 = sphi 0, %s122
      %s146 = sphi 0, %s148
      %s149 = sphi 0, %s146
      %s150 = sphi 0, %s149
      %s166 = sphi 0, %s150
    $region4: #{tpu_custom_call.1} parent=1 // loop_header_branch
      %19 = sbr.rel (%p17) target = $region8
    $region5: #{tpu_custom_call.1} parent=1 // loop_body
      %s21 = ssub.s32 %s16, 1
      %s22 = ssub.s32 %s16, 2
      %s29 = sadd.s32 1, %s24
      %p30 = scmp.ge.s32.totalorder %s29, 2
      %s31 = scalar_select %p30, 0, %s29
      %s32 = sadd.s32 1, %s23
      %s33 = scalar_select %p30, %s32, %s23
      %p34 = scmp.ge.s32.totalorder %s33, 2
      %s35 = scalar_select %p34, 0, %s33
      %s36 = ssub.s32 %s23, %s35
      %s37 = ssub.s32 %s24, %s31
      %s38 = sor.u32 %s36, %s37
      %p39 = scmp.eq.s32.totalorder %s38, 0
      %s41 = sadd.s32 %s40, 1
      %s42 = scalar_select %p39, %s40, %s41
      %p45 = pneg %p39
      %p46 = scmp.eq.s32.totalorder %s16, 3
      %p47 = por %p45, %p46
      %p48 = scmp.ne.s32.totalorder %s40, %s43
      %p49 = scmp.eq.s32.totalorder %s16, 0
      %p50 = por %p48, %p49
      %p51 = scmp.ne.s32.totalorder %s40, %s43
      %p52 = scmp.eq.s32.totalorder %s21, 3
      %p53 = por %p51, %p52
      %p54 = scmp.ne.s32.totalorder %s43, %s44
      %p55 = scmp.eq.s32.totalorder %s21, 0
      %p56 = por %p54, %p55
      %p57 = scmp.ne.s32.totalorder %s43, %s44
      %p58 = scmp.eq.s32.totalorder %s22, 3
      %p59 = por %p57, %p58
      %p61 = scmp.ne.s32.totalorder %s44, %s60
      %p62 = scmp.eq.s32.totalorder %s22, 0
      %p63 = por %p61, %p62
      %s64 = ssub.s32 %s23, %s35
      %p65 = scmp.eq.s32.totalorder %s64, 0
      %s67 = sadd.s32 %s66, 1
      %s68 = scalar_select %p65, %s66, %s67
      %p71 = pneg %p65
      %p72 = scmp.eq.s32.totalorder %s16, 3
      %p73 = por %p71, %p72
      %p74 = scmp.ne.s32.totalorder %s66, %s69
      %p75 = scmp.eq.s32.totalorder %s16, 0
      %p76 = por %p74, %p75
      %p77 = scmp.ne.s32.totalorder %s66, %s69
      %p78 = scmp.eq.s32.totalorder %s21, 3
      %p79 = por %p77, %p78
      %p80 = scmp.ne.s32.totalorder %s69, %s70
      %p81 = scmp.eq.s32.totalorder %s21, 0
      %p82 = por %p80, %p81
      %p83 = scmp.ne.s32.totalorder %s69, %s70
      %p84 = scmp.eq.s32.totalorder %s22, 3
      %p85 = por %p83, %p84
      %p87 = scmp.ne.s32.totalorder %s70, %s86
      %p88 = scmp.eq.s32.totalorder %s22, 0
      %p89 = por %p87, %p88
      %s90 = ssub.s32 %s24, %s31
      %p91 = scmp.eq.s32.totalorder %s90, 0
      %s93 = sadd.s32 %s92, 1
      %s94 = scalar_select %p91, %s92, %s93
      %p97 = pneg %p91
      %p98 = scmp.eq.s32.totalorder %s16, 3
      %p99 = por %p97, %p98
      %p100 = scmp.ne.s32.totalorder %s92, %s95
      %p101 = scmp.eq.s32.totalorder %s16, 0
      %p102 = por %p100, %p101
      %p103 = scmp.ne.s32.totalorder %s92, %s95
      %p104 = scmp.eq.s32.totalorder %s21, 3
      %p105 = por %p103, %p104
      %p106 = scmp.ne.s32.totalorder %s95, %s96
      %p107 = scmp.eq.s32.totalorder %s21, 0
      %p108 = por %p106, %p107
      %p109 = scmp.ne.s32.totalorder %s95, %s96
      %p110 = scmp.eq.s32.totalorder %s22, 3
      %p111 = por %p109, %p110
      %p113 = scmp.ne.s32.totalorder %s96, %s112
      %p114 = scmp.eq.s32.totalorder %s22, 0
      %p115 = por %p113, %p114
      %s116 = ssub.s32 %s23, %s35
      %p117 = scmp.eq.s32.totalorder %s116, 0
      %s119 = sadd.s32 %s118, 1
      %s120 = scalar_select %p117, %s118, %s119
      %p123 = pneg %p117
      %p124 = scmp.eq.s32.totalorder %s16, 3
      %p125 = por %p123, %p124
      %p126 = scmp.ne.s32.totalorder %s118, %s121
      %p127 = scmp.eq.s32.totalorder %s16, 0
      %p128 = por %p126, %p127
      %p129 = scmp.ne.s32.totalorder %s118, %s121
      %p130 = scmp.eq.s32.totalorder %s21, 3
      %p131 = por %p129, %p130
      %p132 = scmp.ne.s32.totalorder %s121, %s122
      %p133 = scmp.eq.s32.totalorder %s21, 0
      %p134 = por %p132, %p133
      %p135 = scmp.ne.s32.totalorder %s121, %s122
      %p136 = scmp.eq.s32.totalorder %s22, 3
      %p137 = por %p135, %p136
      %p139 = scmp.ne.s32.totalorder %s122, %s138
      %p140 = scmp.eq.s32.totalorder %s22, 0
      %p141 = por %p139, %p140
      %s142 = ssub.s32 %s23, %s35
      %s143 = ssub.s32 %s24, %s31
      %s144 = sor.u32 %s142, %s143
      %p145 = scmp.eq.s32.totalorder %s144, 0
      %s147 = sadd.s32 %s146, 1
      %s148 = scalar_select %p145, %s146, %s147
      %p151 = pneg %p145
      %p152 = scmp.eq.s32.totalorder %s16, 3
      %p153 = por %p151, %p152
      %p154 = scmp.ne.s32.totalorder %s146, %s149
      %p155 = scmp.eq.s32.totalorder %s16, 0
      %p156 = por %p154, %p155
      %p157 = scmp.ne.s32.totalorder %s146, %s149
      %p158 = scmp.eq.s32.totalorder %s21, 3
      %p159 = por %p157, %p158
      %p160 = scmp.ne.s32.totalorder %s149, %s150
      %p161 = scmp.eq.s32.totalorder %s21, 0
      %p162 = por %p160, %p161
      %p163 = scmp.ne.s32.totalorder %s149, %s150
      %p164 = scmp.eq.s32.totalorder %s22, 3
      %p165 = por %p163, %p164
      %p167 = scmp.ne.s32.totalorder %s150, %s166
      %p168 = scmp.eq.s32.totalorder %s22, 0
      %p169 = por %p167, %p168
      %p170 = scmp.le.s32.totalorder 1, %s16
      %p171 = scmp.lt.s32.totalorder %s16, 5
      %p172 = pnand %p170, %p171
      %p173 = pneg %p172
      // Predicated region
      $region9: #{tpu_custom_call.1} parent=5 // pred_check
        _
      $region10: #{tpu_custom_call.1} parent=5 // pred_check_branch
        %175 = sbr.rel (%p172) target = $region12
      $region11: #{tpu_custom_call.1} parent=5 // pred_region
        %s176 = ssub.s32 %s16, 1
      $region12: #{tpu_custom_call.1} parent=5 // pred_fallthru
        _
      %p177 = scmp.lt.s32.totalorder %s16, 4
      // Predicated region
      $region13: #{tpu_custom_call.1} parent=5 // pred_check
        %p178 = pneg %p177
      $region14: #{tpu_custom_call.1} parent=5 // pred_check_branch
        %180 = sbr.rel (%p178) target = $region16
      $region15: #{tpu_custom_call.1} parent=5 // pred_region
        // Predicated region
        $region17: #{tpu_custom_call.1} parent=15 // pred_check
          %p181 = pneg %p50
        $region18: #{tpu_custom_call.1} parent=15 // pred_check_branch
          %183 = sbr.rel (%p181) target = $region20
        $region19: #{tpu_custom_call.1} parent=15 // pred_region
          %p184 = scmp.lt.s32.totalorder %s23, 1
          %s185 = scalar_select %p184, %s23, 1
          %p186 = scmp.lt.s32.totalorder %s24, 1
          %s187 = scalar_select %p186, %s24, 1
          %s188 = smul.addr %s185, 2
          %s189 = sadd.s32 %s187, %s188
          %s190 = smul.addr %s189, 8
          %s191 = scalar_lea.vmem %s0, %s190
        $region20: #{tpu_custom_call.1} parent=15 // pred_fallthru
          _
        // Predicated region
        $region21: #{tpu_custom_call.1} parent=15 // pred_check
          %p192 = pneg %p76
        $region22: #{tpu_custom_call.1} parent=15 // pred_check_branch
          %194 = sbr.rel (%p192) target = $region24
        $region23: #{tpu_custom_call.1} parent=15 // pred_region
          %p195 = scmp.lt.s32.totalorder %s23, 1
          %s196 = scalar_select %p195, %s23, 1
          %s197 = scalar_lea.vmem %s1, %s196
        $region24: #{tpu_custom_call.1} parent=15 // pred_fallthru
          _
        // Predicated region
        $region25: #{tpu_custom_call.1} parent=15 // pred_check
          %p198 = pneg %p102
        $region26: #{tpu_custom_call.1} parent=15 // pred_check_branch
          %200 = sbr.rel (%p198) target = $region28
        $region27: #{tpu_custom_call.1} parent=15 // pred_region
          %s201 = sand.u32 %s92, 1
          %s202 = scalar_lea.sflag [#allocation3], %s201
          %s203 = sand.u32 %s92, 1
          %s204 = smul.addr %s203, 8
          %s205 = scalar_lea.vmem [#allocation2], %s204
          %s207 = ssub.s32 128, 128
          %208 = vsyncadd %s202, %s207
          %s209 = smul.addr %s24, 128
          %s210 = scalar_lea.hbm %s2, %s209
          %s212 = sshll.u32 %s205, 4
          %s213 = int_to_ptr.vmem [resolvable:$true] %s212
          %215 = dma.hbm_to_vmem [thread:$0]  %s210, 128, %s213, %s202
        $region28: #{tpu_custom_call.1} parent=15 // pred_fallthru
          _
        // Predicated region
        $region29: #{tpu_custom_call.1} parent=15 // pred_check
          %p216 = pneg %p128
        $region30: #{tpu_custom_call.1} parent=15 // pred_check_branch
          %218 = sbr.rel (%p216) target = $region32
        $region31: #{tpu_custom_call.1} parent=15 // pred_region
          %p219 = scmp.lt.s32.totalorder %s23, 1
          %s220 = scalar_select %p219, %s23, 1
          %s221 = smul.addr %s220, 2
          %s222 = smul.addr %s221, 8
          %s223 = scalar_lea.vmem %s3, %s222
        $region32: #{tpu_custom_call.1} parent=15 // pred_fallthru
          _
      $region16: #{tpu_custom_call.1} parent=5 // pred_fallthru
        _
      %p224 = scmp.le.s32.totalorder 1, %s16
      %p225 = scmp.lt.s32.totalorder %s16, 5
      %p226 = pnand %p224, %p225
      %p227 = pneg %p226
      // Predicated region
      $region33: #{tpu_custom_call.1} parent=5 // pred_check
        _
      $region34: #{tpu_custom_call.1} parent=5 // pred_check_branch
        %229 = sbr.rel (%p226) target = $region36
      $region35: #{tpu_custom_call.1} parent=5 // pred_region
        %s230 = ssub.s32 %s16, 1
        %s231 = sand.u32 %s95, 1
        %s232 = scalar_lea.sflag [#allocation3], %s231
        %s233 = sand.u32 %s95, 1
        %s234 = smul.addr %s233, 8
        %s235 = scalar_lea.vmem [#allocation2], %s234
        // Predicated region
        $region37: #{tpu_custom_call.1} parent=35 // pred_check
          %p236 = pneg %p108
        $region38: #{tpu_custom_call.1} parent=35 // pred_check_branch
          %238 = sbr.rel (%p236) target = $region40
        $region39: #{tpu_custom_call.1} parent=35 // pred_region
          %239 = dma.done %s232, 128
        $region40: #{tpu_custom_call.1} parent=35 // pred_fallthru
          _
        %p240 = scmp.lt.s32.totalorder %s25, 1
        %s241 = scalar_select %p240, %s25, 1
        %p242 = scmp.lt.s32.totalorder %s26, 1
        %s243 = scalar_select %p242, %s26, 1
        %s244 = smul.addr %s241, 2
        %s245 = sadd.s32 %s243, %s244
        %s246 = smul.addr %s245, 8
        %s247 = scalar_lea.vmem %s0, %s246
        %p248 = pneg %p56
        %p249 = pneg %p53
        %p250 = scmp.lt.s32.totalorder %s25, 1
        %s251 = scalar_select %p250, %s25, 1
        %s252 = scalar_lea.vmem %s1, %s251
        %p253 = pneg %p82
        %p254 = pneg %p79
        %s255 = sand.u32 %s95, 1
        %s256 = scalar_lea.sflag [#allocation3], %s255
        %s257 = sand.u32 %s95, 1
        %s258 = smul.addr %s257, 8
        %s259 = scalar_lea.vmem [#allocation2], %s258
        %p260 = pneg %p108
        %p261 = pneg %p105
        %p262 = scmp.lt.s32.totalorder %s25, 1
        %s263 = scalar_select %p262, %s25, 1
        %s264 = smul.addr %s263, 2
        %s265 = smul.addr %s264, 8
        %s266 = scalar_lea.vmem %s3, %s265
        %p267 = pneg %p134
        %p268 = pneg %p131
        %p269 = pneg %p162
        %p270 = pneg %p159
        %s271 = sand.u32 %s149, 1
        %s272 = scalar_lea.sflag [#allocation4], %s271
        %s273 = sand.u32 %s149, 1
        %s274 = smul.addr %s273, 8
        %s275 = scalar_lea.vmem [#allocation5], %s274
        %p276 = scmp.lt.s32.totalorder %s25, 1
        %s277 = scalar_select %p276, %s25, 1
        %p278 = scmp.lt.s32.totalorder %s26, 1
        %s279 = scalar_select %p278, %s26, 1
        %s280 = smul.addr %s277, 2
        %s281 = sadd.s32 %s279, %s280
        %s282 = smul.addr %s281, 8
        %s283 = scalar_lea.vmem %s0, %s282
        %p284 = scmp.lt.s32.totalorder %s25, 1
        %s285 = scalar_select %p284, %s25, 1
        %s286 = scalar_lea.vmem %s1, %s285
        %p287 = scmp.lt.s32.totalorder %s25, 1
        %s288 = scalar_select %p287, %s25, 1
        %s289 = smul.addr %s288, 2
        %s290 = smul.addr %s289, 8
        %s291 = scalar_lea.vmem %s3, %s290
        %v292 = vld [vmem:[%s283] sm:$0xff]
        %v293 = vld [vmem:[%s286] sm:$0x1]
        %295 = vset.pattern.permute.xlu0 0
        %296 = vperm.xlu0 %295, %v292
        %v297 = vpop.permute.xlu0 %296
        %v300 = vlaneseq
        %v301 = vshrl.u32 %v300, 7
        %v302 = vsub.s32 0, %v301
        %v303 = vrot.slane %v293, %v302
        %v305 = vadd.f32 %v297, %v303
        %vm306 = vcmp.gt.f32.partialorder %v305, 0.0
        %v307 = vmul.f32 %v305, 0.2
        %v308 = vsel %vm306, %v305, %v307
        %v309 = vld [vmem:[%s235] sm:$0xff]
        %v310 = vadd.f32 %v308, %v309
        %vm311 = vcmask 130048
        %v312 = vsel %vm311, %v310, -inf
        %313 = vmax.xlane.f32.xlu0 %v312
        %v314 = vpop.xlane.xlu0 %313
        %v315 = vsub.f32 %v310, %v314
        %v316 = vmul.f32 %v315, 1.442695
        %v317 = vpow.pop %v316
        %v318 = vsel %vm311, %v317, 0.0
        %319 = vadd.xlane.f32.xlu0 %v318
        %v320 = vpop.xlane.xlu0 %319
        %v321 = vrcp.pop %v320
        %v322 = vmul.f32 %v317, %v321
        %v323 = vld [vmem:[%s291] sm:$0xff]
        %v324 = vld [vmem:[%s291 + $0x8] sm:$0xff]
        %v326 = vsel %vm311, %v322, 0
        %328 = vmatprep.subr.mxu0 0.0
        %329 = vmatpush1.msra.mxu0 %v323
        %330 = vmatprep.subr.mxu0 0.0
        %331 = vmatpush1.msra.mxu0 %v324
        %332 = vmatprep.subr.mxu0 0.0
        %333 = vmatpush1.msra.mxu0 0.0
        %334 = vmatprep.subr.mxu0 0.0
        %335 = vmatpush1.msra.mxu0 0.0
        %336 = vmatprep.subr.mxu0 0.0
        %337 = vmatpush1.msra.mxu0 0.0
        %338 = vmatprep.subr.mxu0 0.0
        %339 = vmatpush1.msra.mxu0 0.0
        %340 = vmatprep.subr.mxu0 0.0
        %341 = vmatpush1.msra.mxu0 0.0
        %342 = vmatprep.subr.mxu0 0.0
        %343 = vmatpush1.msra.mxu0 0.0
        %344 = vmatprep.subr.mxu0 0.0
        %345 = vmatpush1.msra.mxu0 0.0
        %346 = vmatprep.subr.mxu0 0.0
        %347 = vmatpush1.msra.mxu0 0.0
        %348 = vmatprep.subr.mxu0 0.0
        %349 = vmatpush1.msra.mxu0 0.0
        %350 = vmatprep.subr.mxu0 0.0
        %351 = vmatpush1.msra.mxu0 0.0
        %352 = vmatprep.subr.mxu0 0.0
        %353 = vmatpush1.msra.mxu0 0.0
        %354 = vmatprep.subr.mxu0 0.0
        %355 = vmatpush1.msra.mxu0 0.0
        %356 = vmatprep.subr.mxu0 0.0
        %357 = vmatpush1.msra.mxu0 0.0
        %358 = vmatprep.subr.mxu0 0.0
        %359 = vmatpush1.msra.mxu0 0.0
        %360 = vmatprep.subr.mxu0 0.0
        %361 = vmatpush1.msra.mxu0 0.0
        %362 = vmatprep.subr.mxu0 0.0
        %363 = vmatpush1.msra.mxu0 0.0
        %364 = vmatprep.subr.mxu0 0.0
        %365 = vmatpush1.msra.mxu0 0.0
        %366 = vmatprep.subr.mxu0 0.0
        %367 = vmatpush1.msra.mxu0 0.0
        %368 = vmatprep.subr.mxu0 0.0
        %369 = vmatpush1.msra.mxu0 0.0
        %370 = vmatprep.subr.mxu0 0.0
        %371 = vmatpush1.msra.mxu0 0.0
        %372 = vmatprep.subr.mxu0 0.0
        %373 = vmatpush1.msra.mxu0 0.0
        %374 = vmatprep.subr.mxu0 0.0
        %375 = vmatpush1.msra.mxu0 0.0
        %376 = vmatprep.subr.mxu0 0.0
        %377 = vmatpush1.msra.mxu0 0.0
        %378 = vmatprep.subr.mxu0 0.0
        %379 = vmatpush1.msra.mxu0 0.0
        %380 = vmatprep.subr.mxu0 0.0
        %381 = vmatpush1.msra.mxu0 0.0
        %382 = vmatprep.subr.mxu0 0.0
        %383 = vmatpush1.msra.mxu0 0.0
        %384 = vmatprep.subr.mxu0 0.0
        %385 = vmatpush1.msra.mxu0 0.0
        %386 = vmatprep.subr.mxu0 0.0
        %387 = vmatpush1.msra.mxu0 0.0
        %388 = vmatprep.subr.mxu0 0.0
        %389 = vmatpush1.msra.mxu0 0.0
        %390 = vmatprep.subr.mxu0 0.0
        %391 = vmatpush1.msra.mxu0 0.0
        %392 = vmatprep.mubr.f32.mxu0 0.0
        %393 = vmatmul.mubr.f32.gmra.mrb[0].mxu0 %v326
        %v394 = vpop.f32.mrb[0].mxu0
        %v395 = vadd.f32 0.0, %v394
        %v396 = vpop.f32.mrb[0].mxu0
        %397 = vdwg.mxu0
        %398 = vst [vmem:[%s275] sm:$0xff] %v395
        %s399 = sand.u32 %s149, 1
        %s400 = scalar_lea.sflag [#allocation4], %s399
        %s401 = sand.u32 %s149, 1
        %s402 = smul.addr %s401, 8
        %s403 = scalar_lea.vmem [#allocation5], %s402
        // Predicated region
        $region41: #{tpu_custom_call.1} parent=35 // pred_check
          %p404 = pneg %p159
        $region42: #{tpu_custom_call.1} parent=35 // pred_check_branch
          %406 = sbr.rel (%p404) target = $region44
        $region43: #{tpu_custom_call.1} parent=35 // pred_region
          %s408 = ssub.s32 128, 128
          %409 = vsyncadd %s400, %s408
          %s410 = smul.addr %s25, 2
          %s411 = sadd.s32 %s26, %s410
          %s412 = smul.addr %s411, 128
          %s413 = scalar_lea.hbm %s4, %s412
          %s415 = sshll.u32 %s403, 4
          %s416 = int_to_ptr.vmem [resolvable:$true] %s415
          %418 = dma.vmem_to_hbm [thread:$0]  %s416, 128, %s413, %s400
        $region44: #{tpu_custom_call.1} parent=35 // pred_fallthru
          _
      $region36: #{tpu_custom_call.1} parent=5 // pred_fallthru
        _
      %p419 = scmp.le.s32.totalorder 2, %s16
      // Predicated region
      $region45: #{tpu_custom_call.1} parent=5 // pred_check
        %p420 = pneg %p419
      $region46: #{tpu_custom_call.1} parent=5 // pred_check_branch
        %422 = sbr.rel (%p420) target = $region48
      $region47: #{tpu_custom_call.1} parent=5 // pred_region
        %s423 = ssub.s32 %s16, 2
        // Predicated region
        $region49: #{tpu_custom_call.1} parent=47 // pred_check
          %p424 = pneg %p165
        $region50: #{tpu_custom_call.1} parent=47 // pred_check_branch
          %426 = sbr.rel (%p424) target = $region52
        $region51: #{tpu_custom_call.1} parent=47 // pred_region
          %s427 = sand.u32 %s150, 1
          %s428 = scalar_lea.sflag [#allocation4], %s427
          %s429 = sand.u32 %s150, 1
          %s430 = smul.addr %s429, 8
          %s431 = scalar_lea.vmem [#allocation5], %s430
          %432 = dma.done %s428, 128
        $region52: #{tpu_custom_call.1} parent=47 // pred_fallthru
          _
      $region48: #{tpu_custom_call.1} parent=5 // pred_fallthru
        _
    $region6: #{tpu_custom_call.1} parent=1 // loop_footer
      %s20 = sadd.s32 1, %s16
    $region7: #{tpu_custom_call.1} parent=1 // loop_footer_branch
      %15 = sbr.rel target = $region3
    $region8: #{tpu_custom_call.1} parent=1 // loop_exit
      _
    %433 = vsyncpa [#allocation3], 1
    %s434 = scalar_lea.sflag [#allocation3], 1
    %435 = vsyncpa %s434, 1
    %436 = vsyncpa [#allocation4], 1
    %s437 = scalar_lea.sflag [#allocation4], 1
    %438 = vsyncpa %s437, 1

</llo_original>
